<compile_context>
chip_gen: v6e
topology: v6e:2x2x1
jax: 0.10.0
libtpu: 0.0.40
codegen_flags: <defaults>
</compile_context>

<pallas_src>
import functools
import math

import jax
import jax.numpy as jnp
from jax.experimental import pallas as pl
from jax.experimental.pallas import tpu as pltpu


def _round_up(a, b):
    return (a + b - 1) // b * b


def ffn_kernel(x_ref, g_ref, beta_ref, w1_ref, b1_ref, w2_ref, b2_ref, o_ref,
               xn_ref, acc_ref, *, d_model, eps):
    k = pl.program_id(1)
    nk = pl.num_programs(1)

    # ---- Prologue (once per row tile): masked LayerNorm into VMEM scratch, zero accumulator.
    @pl.when(k == 0)
    def _():
        x = x_ref[...].astype(jnp.float32)          # (TM, Dp) with lanes >= d_model zero-padded
        Dp = x.shape[-1]
        lane = jax.lax.broadcasted_iota(jnp.int32, (1, Dp), 1)
        mask = lane < d_model
        inv_d = 1.0 / float(d_model)
        mean = jnp.sum(x, axis=-1, keepdims=True) * inv_d
        diff = jnp.where(mask, x - mean, 0.0)
        var = jnp.sum(diff * diff, axis=-1, keepdims=True) * inv_d
        xn = diff * jax.lax.rsqrt(var + eps)
        xn = xn * g_ref[...].astype(jnp.float32) + beta_ref[...].astype(jnp.float32)
        xn_ref[...] = xn.astype(xn_ref.dtype)       # store in MXU operand dtype
        acc_ref[...] = jnp.zeros_like(acc_ref)

    # ---- Body: one d_ff chunk. Native-dtype MXU operands, f32 accumulation.
    h = jnp.dot(xn_ref[...], w1_ref[...], preferred_element_type=jnp.float32)
    h = h + b1_ref[...].astype(jnp.float32)

    # tanh-approx GELU in f32 (EUP tanh overlaps with MXU work).
    c = math.sqrt(2.0 / math.pi)
    h = 0.5 * h * (1.0 + jnp.tanh(c * (h + 0.044715 * (h * h * h))))

    acc_ref[...] += jnp.dot(h.astype(w2_ref.dtype), w2_ref[...],
                            preferred_element_type=jnp.float32)

    # ---- Epilogue (last d_ff chunk): bias + residual (x re-read from VMEM), write output.
    @pl.when(k == nk - 1)
    def _():
        out = acc_ref[...] + b2_ref[...].astype(jnp.float32) + x_ref[...].astype(jnp.float32)
        o_ref[...] = out.astype(o_ref.dtype)


def positionwise_feed_forward(x, gamma, beta, w1, b1, w2, b2, *,
                              tile_rows=256, tile_ff=512, eps=1e-6):
    """x: (B, S, d_model); w1: (d_model, d_ff); w2: (d_ff, d_model). Returns (B, S, d_model)."""
    B, S, d_model = x.shape
    d_ff = w1.shape[1]
    N = B * S

    # Lane-dense padding of feature axes, row padding to the row tile.
    Dp = _round_up(d_model, 128)
    TM = min(tile_rows, _round_up(N, 8))
    Np = _round_up(N, TM)
    TF = min(tile_ff, _round_up(d_ff, 128))
    FFp = _round_up(d_ff, TF)

    x2 = jnp.pad(x.reshape(N, d_model), ((0, Np - N), (0, Dp - d_model)))
    gp = jnp.pad(gamma.reshape(1, d_model), ((0, 0), (0, Dp - d_model)))
    bp = jnp.pad(beta.reshape(1, d_model), ((0, 0), (0, Dp - d_model)))
    w1p = jnp.pad(w1, ((0, Dp - d_model), (0, FFp - d_ff)))
    b1p = jnp.pad(b1.reshape(1, d_ff), ((0, 0), (0, FFp - d_ff)))
    w2p = jnp.pad(w2, ((0, FFp - d_ff), (0, Dp - d_model)))
    b2p = jnp.pad(b2.reshape(1, d_model), ((0, 0), (0, Dp - d_model)))

    grid = (Np // TM, FFp // TF)
    kernel = functools.partial(ffn_kernel, d_model=d_model, eps=eps)

    out2 = pl.pallas_call(
        kernel,
        out_shape=jax.ShapeDtypeStruct((Np, Dp), x.dtype),
        grid_spec=pltpu.PrefetchScalarGridSpec(
            num_scalar_prefetch=0,
            grid=grid,
            in_specs=[
                pl.BlockSpec((TM, Dp), lambda i, k: (i, 0)),   # x rows (resident across k)
                pl.BlockSpec((1, Dp), lambda i, k: (0, 0)),    # gamma
                pl.BlockSpec((1, Dp), lambda i, k: (0, 0)),    # beta
                pl.BlockSpec((Dp, TF), lambda i, k: (0, k)),   # w1 chunk (streams over k)
                pl.BlockSpec((1, TF), lambda i, k: (0, k)),    # b1 chunk
                pl.BlockSpec((TF, Dp), lambda i, k: (k, 0)),   # w2 chunk (streams over k)
                pl.BlockSpec((1, Dp), lambda i, k: (0, 0)),    # b2
            ],
            out_specs=pl.BlockSpec((TM, Dp), lambda i, k: (i, 0)),
            scratch_shapes=[
                pltpu.VMEM((TM, Dp), w1.dtype),     # xn (LayerNorm output, MXU operand dtype)
                pltpu.VMEM((TM, Dp), jnp.float32),  # f32 accumulator
            ],
        ),
        compiler_params=pltpu.CompilerParams(
            dimension_semantics=("parallel", "arbitrary"),
            vmem_limit_bytes=64 * 1024 * 1024,
        ),
    )(x2, gp, bp, w1p, b1p, w2p, b2p)

    return out2[:N, :d_model].reshape(B, S, d_model)


def reference(x, gamma, beta, w1, b1, w2, b2):
    """Pure-JAX reference mirroring the PyTorch forward (eval mode)."""
    xf = x.astype(jnp.float32)
    mean = jnp.mean(xf, axis=-1, keepdims=True)
    var = jnp.mean((xf - mean) ** 2, axis=-1, keepdims=True)
    xn = (xf - mean) / jnp.sqrt(var + 1e-6) * gamma + beta
    h = xn @ w1 + b1
    c = math.sqrt(2.0 / math.pi)
    h = 0.5 * h * (1.0 + jnp.tanh(c * (h + 0.044715 * h ** 3)))
    out = h @ w2 + b2
    return (out + xf).astype(x.dtype)


def _make_params(key, d_model, d_ff):
    kx, kw1, kb1, kw2, kb2 = jax.random.split(key, 5)
    lim1 = 1.0 / math.sqrt(d_model)
    lim2 = 1.0 / math.sqrt(d_ff)
    w1 = jax.random.uniform(kw1, (d_model, d_ff), minval=-lim1, maxval=lim1, dtype=jnp.float32)
    b1 = jax.random.uniform(kb1, (d_ff,), minval=-lim1, maxval=lim1, dtype=jnp.float32)
    w2 = jax.random.uniform(kw2, (d_ff, d_model), minval=-lim2, maxval=lim2, dtype=jnp.float32)
    b2 = jax.random.uniform(kb2, (d_model,), minval=-lim2, maxval=lim2, dtype=jnp.float32)
    gamma = jnp.ones((d_model,), dtype=jnp.float32)
    beta = jnp.zeros((d_model,), dtype=jnp.float32)
    return kx, w1, b1, w2, b2, gamma, beta


if __name__ == "__main__":
    # Test 1: small, nicely shaped demo.
    B, S, d_model, d_ff = 2, 8, 32, 64
    kx, w1, b1, w2, b2, gamma, beta = _make_params(jax.random.PRNGKey(0), d_model, d_ff)
    x = jax.random.normal(kx, (B, S, d_model), dtype=jnp.float32)

    out = positionwise_feed_forward(x, gamma, beta, w1, b1, w2, b2)
    out = jax.block_until_ready(out)
    ref = reference(x, gamma, beta, w1, b1, w2, b2)
    assert out.shape == x.shape and out.dtype == x.dtype
    assert jnp.allclose(out, ref, atol=1e-4, rtol=1e-4), float(jnp.max(jnp.abs(out - ref)))

    # Test 2: odd, non-aligned shapes (exercises row/lane padding + masked LayerNorm).
    B2, S2, dm2, dff2 = 2, 5, 48, 100
    kx2, w1b, b1b, w2b, b2b, gamma2, beta2 = _make_params(jax.random.PRNGKey(1), dm2, dff2)
    x_odd = jax.random.normal(kx2, (B2, S2, dm2), dtype=jnp.float32)

    out2 = positionwise_feed_forward(x_odd, gamma2, beta2, w1b, b1b, w2b, b2b)
    out2 = jax.block_until_ready(out2)
    ref2 = reference(x_odd, gamma2, beta2, w1b, b1b, w2b, b2b)
    assert out2.shape == x_odd.shape and out2.dtype == x_odd.dtype
    assert jnp.allclose(out2, ref2, atol=1e-4, rtol=1e-4), float(jnp.max(jnp.abs(out2 - ref2)))

    print("KERNEL_OK")
</pallas_src>

<mosaic_0001>
module attributes {stable_mosaic.version = 11 : i64} {
  func.func @ffn_kernel(%arg0: i32, %arg1: i32, %arg2: memref<16x128xf32, #tpu.memory_space<vmem>>, %arg3: memref<1x128xf32, #tpu.memory_space<vmem>>, %arg4: memref<1x128xf32, #tpu.memory_space<vmem>>, %arg5: memref<128x128xf32, #tpu.memory_space<vmem>>, %arg6: memref<1x128xf32, #tpu.memory_space<vmem>>, %arg7: memref<128x128xf32, #tpu.memory_space<vmem>>, %arg8: memref<1x128xf32, #tpu.memory_space<vmem>>, %arg9: memref<16x128xf32, #tpu.memory_space<vmem>>, %arg10: memref<16x128xf32, #tpu.memory_space<vmem>>, %arg11: memref<16x128xf32, #tpu.memory_space<vmem>>) attributes {dimension_semantics = [#tpu.dimension_semantics<parallel>, #tpu.dimension_semantics<arbitrary>], iteration_bounds = array<i64: 1, 1>, scalar_prefetch = 0 : i64, scratch_operands = 2 : i64, tpu.core_type = #tpu.core_type<tc>, window_params = [{transform_indices = @transform_0, window_bounds = array<i64: 16, 128>}, {pipeline_mode = #tpu.pipeline_mode<synchronous>, transform_indices = @transform_1, window_bounds = array<i64: 1, 128>}, {pipeline_mode = #tpu.pipeline_mode<synchronous>, transform_indices = @transform_2, window_bounds = array<i64: 1, 128>}, {transform_indices = @transform_3, window_bounds = array<i64: 128, 128>}, {transform_indices = @transform_4, window_bounds = array<i64: 1, 128>}, {transform_indices = @transform_5, window_bounds = array<i64: 128, 128>}, {pipeline_mode = #tpu.pipeline_mode<synchronous>, transform_indices = @transform_6, window_bounds = array<i64: 1, 128>}, {transform_indices = @transform_7, window_bounds = array<i64: 16, 128>}]} {
    %c0_i32 = arith.constant 0 : i32
    %0 = arith.cmpi eq, %arg1, %c0_i32 : i32
    %1 = arith.extui %0 : i1 to i32
    %c0_i32_0 = arith.constant 0 : i32
    %2 = arith.cmpi ne, %1, %c0_i32_0 : i32
    scf.if %2 {
      %c0_19 = arith.constant 0 : index
      %c0_20 = arith.constant 0 : index
      %30 = vector.load %arg2[%c0_19, %c0_20] : memref<16x128xf32, #tpu.memory_space<vmem>>, vector<16x128xf32>
      %31 = tpu.iota {dimensions = array<i32: 1>} : vector<1x128xi32>
      %c32_i32 = arith.constant 32 : i32
      %32 = vector.broadcast %c32_i32 : i32 to vector<1x128xi32>
      %33 = arith.cmpi slt, %31, %32 : vector<1x128xi32>
      %cst_21 = arith.constant dense<0.000000e+00> : vector<16xf32>
      %34 = vector.multi_reduction <add>, %30, %cst_21 [1] : vector<16x128xf32> to vector<16xf32>
      %35 = vector.shape_cast %34 : vector<16xf32> to vector<16x1xf32>
      %cst_22 = arith.constant 3.125000e-02 : f32
      %36 = vector.broadcast %cst_22 : f32 to vector<16x1xf32>
      %37 = arith.mulf %35, %36 : vector<16x1xf32>
      %38 = vector.broadcast %37 : vector<16x1xf32> to vector<16x128xf32>
      %39 = arith.subf %30, %38 : vector<16x128xf32>
      %cst_23 = arith.constant 0.000000e+00 : f32
      %40 = vector.shape_cast %33 : vector<1x128xi1> to vector<1x128xi1>
      %41 = vector.broadcast %40 : vector<1x128xi1> to vector<16x128xi1>
      %42 = vector.broadcast %cst_23 : f32 to vector<16x128xf32>
      %43 = arith.select %41, %39, %42 : vector<16x128xi1>, vector<16x128xf32>
      %44 = arith.mulf %43, %43 : vector<16x128xf32>
      %cst_24 = arith.constant dense<0.000000e+00> : vector<16xf32>
      %45 = vector.multi_reduction <add>, %44, %cst_24 [1] : vector<16x128xf32> to vector<16xf32>
      %46 = vector.shape_cast %45 : vector<16xf32> to vector<16x1xf32>
      %cst_25 = arith.constant 3.125000e-02 : f32
      %47 = vector.broadcast %cst_25 : f32 to vector<16x1xf32>
      %48 = arith.mulf %46, %47 : vector<16x1xf32>
      %cst_26 = arith.constant 9.99999997E-7 : f32
      %49 = vector.broadcast %cst_26 : f32 to vector<16x1xf32>
      %50 = arith.addf %48, %49 : vector<16x1xf32>
      %51 = math.rsqrt %50 : vector<16x1xf32>
      %52 = vector.broadcast %51 : vector<16x1xf32> to vector<16x128xf32>
      %53 = arith.mulf %43, %52 : vector<16x128xf32>
      %c0_27 = arith.constant 0 : index
      %c0_28 = arith.constant 0 : index
      %54 = vector.load %arg3[%c0_27, %c0_28] : memref<1x128xf32, #tpu.memory_space<vmem>>, vector<1x128xf32>
      %55 = vector.broadcast %54 : vector<1x128xf32> to vector<16x128xf32>
      %56 = arith.mulf %53, %55 : vector<16x128xf32>
      %c0_29 = arith.constant 0 : index
      %c0_30 = arith.constant 0 : index
      %57 = vector.load %arg4[%c0_29, %c0_30] : memref<1x128xf32, #tpu.memory_space<vmem>>, vector<1x128xf32>
      %58 = vector.broadcast %57 : vector<1x128xf32> to vector<16x128xf32>
      %59 = arith.addf %56, %58 : vector<16x128xf32>
      %c0_31 = arith.constant 0 : index
      %c0_32 = arith.constant 0 : index
      %60 = vector.load %arg10[%c0_31, %c0_32] : memref<16x128xf32, #tpu.memory_space<vmem>>, vector<16x128xf32>
      tpu.vector_store %arg10[%c0_31, %c0_32], %59 {strides = array<i32>} : memref<16x128xf32, #tpu.memory_space<vmem>>, vector<16x128xf32>,
      %cst_33 = arith.constant 0.000000e+00 : f32
      %61 = vector.broadcast %cst_33 : f32 to vector<16x128xf32>
      %c0_34 = arith.constant 0 : index
      %c0_35 = arith.constant 0 : index
      %62 = vector.load %arg11[%c0_34, %c0_35] : memref<16x128xf32, #tpu.memory_space<vmem>>, vector<16x128xf32>
      tpu.vector_store %arg11[%c0_34, %c0_35], %61 {strides = array<i32>} : memref<16x128xf32, #tpu.memory_space<vmem>>, vector<16x128xf32>,
    } else {
    }
    %c0 = arith.constant 0 : index
    %c0_1 = arith.constant 0 : index
    %3 = vector.load %arg10[%c0, %c0_1] : memref<16x128xf32, #tpu.memory_space<vmem>>, vector<16x128xf32>
    %c0_2 = arith.constant 0 : index
    %c0_3 = arith.constant 0 : index
    %4 = vector.load %arg5[%c0_2, %c0_3] : memref<128x128xf32, #tpu.memory_space<vmem>>, vector<128x128xf32>
    %cst = arith.constant dense<0.000000e+00> : vector<16x128xf32>
    %5 = tpu.matmul %3, %4, %cst {dimension_numbers = #tpu.dot_dimension_numbers<[1], [0], [0], [1], [0, 0, 1, 1], [], []>} : vector<16x128xf32>, vector<128x128xf32>, vector<16x128xf32> -> vector<16x128xf32>
    %c0_4 = arith.constant 0 : index
    %c0_5 = arith.constant 0 : index
    %6 = vector.load %arg6[%c0_4, %c0_5] : memref<1x128xf32, #tpu.memory_space<vmem>>, vector<1x128xf32>
    %7 = vector.broadcast %6 : vector<1x128xf32> to vector<16x128xf32>
    %8 = arith.addf %5, %7 : vector<16x128xf32>
    %cst_6 = arith.constant 5.000000e-01 : f32
    %9 = vector.broadcast %cst_6 : f32 to vector<16x128xf32>
    %10 = arith.mulf %9, %8 : vector<16x128xf32>
    %11 = arith.mulf %8, %8 : vector<16x128xf32>
    %12 = arith.mulf %11, %8 : vector<16x128xf32>
    %cst_7 = arith.constant 4.471500e-02 : f32
    %13 = vector.broadcast %cst_7 : f32 to vector<16x128xf32>
    %14 = arith.mulf %13, %12 : vector<16x128xf32>
    %15 = arith.addf %8, %14 : vector<16x128xf32>
    %cst_8 = arith.constant 0.797884583 : f32
    %16 = vector.broadcast %cst_8 : f32 to vector<16x128xf32>
    %17 = arith.mulf %16, %15 : vector<16x128xf32>
    %18 = math.tanh %17 : vector<16x128xf32>
    %cst_9 = arith.constant 1.000000e+00 : f32
    %19 = vector.broadcast %cst_9 : f32 to vector<16x128xf32>
    %20 = arith.addf %19, %18 : vector<16x128xf32>
    %21 = arith.mulf %10, %20 : vector<16x128xf32>
    %c0_10 = arith.constant 0 : index
    %c0_11 = arith.constant 0 : index
    %22 = vector.load %arg11[%c0_10, %c0_11] : memref<16x128xf32, #tpu.memory_space<vmem>>, vector<16x128xf32>
    %c0_12 = arith.constant 0 : index
    %c0_13 = arith.constant 0 : index
    %23 = vector.load %arg7[%c0_12, %c0_13] : memref<128x128xf32, #tpu.memory_space<vmem>>, vector<128x128xf32>
    %cst_14 = arith.constant dense<0.000000e+00> : vector<16x128xf32>
    %24 = tpu.matmul %21, %23, %cst_14 {dimension_numbers = #tpu.dot_dimension_numbers<[1], [0], [0], [1], [0, 0, 1, 1], [], []>} : vector<16x128xf32>, vector<128x128xf32>, vector<16x128xf32> -> vector<16x128xf32>
    %25 = arith.addf %22, %24 : vector<16x128xf32>
    %c0_15 = arith.constant 0 : index
    %c0_16 = arith.constant 0 : index
    %26 = vector.load %arg11[%c0_15, %c0_16] : memref<16x128xf32, #tpu.memory_space<vmem>>, vector<16x128xf32>
    tpu.vector_store %arg11[%c0_15, %c0_16], %25 {strides = array<i32>} : memref<16x128xf32, #tpu.memory_space<vmem>>, vector<16x128xf32>,
    %c0_i32_17 = arith.constant 0 : i32
    %27 = arith.cmpi eq, %arg1, %c0_i32_17 : i32
    %28 = arith.extui %27 : i1 to i32
    %c0_i32_18 = arith.constant 0 : i32
    %29 = arith.cmpi ne, %28, %c0_i32_18 : i32
    scf.if %29 {
      %c0_19 = arith.constant 0 : index
      %c0_20 = arith.constant 0 : index
      %30 = vector.load %arg11[%c0_19, %c0_20] : memref<16x128xf32, #tpu.memory_space<vmem>>, vector<16x128xf32>
      %c0_21 = arith.constant 0 : index
      %c0_22 = arith.constant 0 : index
      %31 = vector.load %arg8[%c0_21, %c0_22] : memref<1x128xf32, #tpu.memory_space<vmem>>, vector<1x128xf32>
      %32 = vector.broadcast %31 : vector<1x128xf32> to vector<16x128xf32>
      %33 = arith.addf %30, %32 : vector<16x128xf32>
      %c0_23 = arith.constant 0 : index
      %c0_24 = arith.constant 0 : index
      %34 = vector.load %arg2[%c0_23, %c0_24] : memref<16x128xf32, #tpu.memory_space<vmem>>, vector<16x128xf32>
      %35 = arith.addf %33, %34 : vector<16x128xf32>
      %c0_25 = arith.constant 0 : index
      %c0_26 = arith.constant 0 : index
      %36 = vector.load %arg9[%c0_25, %c0_26] : memref<16x128xf32, #tpu.memory_space<vmem>>, vector<16x128xf32>
      tpu.vector_store %arg9[%c0_25, %c0_26], %35 {strides = array<i32>} : memref<16x128xf32, #tpu.memory_space<vmem>>, vector<16x128xf32>,
    } else {
    }
    return
  }
  func.func @transform_0(%arg0: i32, %arg1: i32) -> (i32, i32) {
    %c0_i32 = arith.constant 0 : i32
    %c0_i32_0 = arith.constant 0 : i32
    return %arg0, %c0_i32 : i32, i32
  }
  func.func @transform_1(%arg0: i32, %arg1: i32) -> (i32, i32) {
    %c0_i32 = arith.constant 0 : i32
    %c0_i32_0 = arith.constant 0 : i32
    %c0_i32_1 = arith.constant 0 : i32
    return %c0_i32, %c0_i32_0 : i32, i32
  }
  func.func @transform_2(%arg0: i32, %arg1: i32) -> (i32, i32) {
    %c0_i32 = arith.constant 0 : i32
    %c0_i32_0 = arith.constant 0 : i32
    %c0_i32_1 = arith.constant 0 : i32
    return %c0_i32, %c0_i32_0 : i32, i32
  }
  func.func @transform_3(%arg0: i32, %arg1: i32) -> (i32, i32) {
    %c0_i32 = arith.constant 0 : i32
    %c0_i32_0 = arith.constant 0 : i32
    return %c0_i32, %arg1 : i32, i32
  }
  func.func @transform_4(%arg0: i32, %arg1: i32) -> (i32, i32) {
    %c0_i32 = arith.constant 0 : i32
    %c0_i32_0 = arith.constant 0 : i32
    return %c0_i32, %arg1 : i32, i32
  }
  func.func @transform_5(%arg0: i32, %arg1: i32) -> (i32, i32) {
    %c0_i32 = arith.constant 0 : i32
    %c0_i32_0 = arith.constant 0 : i32
    return %arg1, %c0_i32 : i32, i32
  }
  func.func @transform_6(%arg0: i32, %arg1: i32) -> (i32, i32) {
    %c0_i32 = arith.constant 0 : i32
    %c0_i32_0 = arith.constant 0 : i32
    %c0_i32_1 = arith.constant 0 : i32
    return %c0_i32, %c0_i32_0 : i32, i32
  }
  func.func @transform_7(%arg0: i32, %arg1: i32) -> (i32, i32) {
    %c0_i32 = arith.constant 0 : i32
    %c0_i32_0 = arith.constant 0 : i32
    return %arg0, %c0_i32 : i32, i32
  }
}

</mosaic_0001>

<llo_original>
// kernel: tpu_custom_call.1
$region0: #{tpu_custom_call.1}
  #allocation0 [shape = 'u32[]', space=smem, size = 0x4, offset = 0x4, fixed_abs, tag = 'smem constant byte address 0x4 - core index']
  #allocation1 [shape = 'u32[144,128]{1,0:T(1,128)}', space=vmem, size = 0x12000, scoped, tag = 'internal scratch']
  #allocation2 [shape = 'f32[16,128]{1,0:T(8,128)}', space=vmem, size = 0x2000, scoped, tag = 'scratch operand']
  #allocation3 [shape = 'f32[16,128]{1,0:T(8,128)}', space=vmem, size = 0x2000, scoped, tag = 'scratch operand']
  %s0 = inlined_call_operand.hbm [shape: f32[16,128], index: 0, kind: input, shape index: {}]
  %s1 = inlined_call_operand.vmem [shape: f32[1,128], index: 1, kind: input, shape index: {}]
  %s2 = inlined_call_operand.vmem [shape: f32[1,128], index: 2, kind: input, shape index: {}]
  %s3 = inlined_call_operand.hbm [shape: f32[128,128], index: 3, kind: input, shape index: {}]
  %s4 = inlined_call_operand.vmem [shape: f32[1,128], index: 4, kind: input, shape index: {}]
  %s5 = inlined_call_operand.hbm [shape: f32[128,128], index: 5, kind: input, shape index: {}]
  %s6 = inlined_call_operand.vmem [shape: f32[1,128], index: 6, kind: input, shape index: {}]
  %s7 = inlined_call_operand.hbm [shape: f32[16,128], index: 7, kind: output, shape index: {}]
  %s8 = sld [smem:[#allocation0]]
  $region58: #{tpu_custom_call.1} parent=0
    _
  %s10 = ssub.s32 1, %s8
  %s11 = scalar_select 0, %s10, %s8
  $region1: #{tpu_custom_call.1} parent=0
    #allocation4 [shape = 'u8[8192]{0}', space=vmem, size = 0x2000, scoped, tag = 'input window, operand 0, single buffered']
    #allocation5 [shape = 's32[1]{0}', space=sflag, size = 0x4, scoped, tag = 'scoped memory for tpu_custom_call.1']
    #allocation6 [shape = 's32[1]{0}', space=sflag, size = 0x4, scoped, tag = 'scoped memory for tpu_custom_call.1']
    #allocation7 [shape = 'u8[65536]{0}', space=vmem, size = 0x10000, scoped, tag = 'input window, operand 3, single buffered']
    #allocation8 [shape = 's32[1]{0}', space=sflag, size = 0x4, scoped, tag = 'scoped memory for tpu_custom_call.1']
    #allocation9 [shape = 'u8[65536]{0}', space=vmem, size = 0x10000, scoped, tag = 'input window, operand 5, single buffered']
    #allocation10 [shape = 'u8[8192]{0}', space=vmem, size = 0x2000, scoped, tag = 'output window, operand 0, single buffered']
    %12 = vsyncpa [#allocation5], 0
    %13 = vsyncpa [#allocation8], 0
    %14 = vsyncpa [#allocation6], 0
    // Predicated region
    $region2: #{tpu_custom_call.1} parent=1 // pred_check
      _
    $region3: #{tpu_custom_call.1} parent=1 // pred_check_branch
      %16 = sbr.rel (0) target = $region5
    $region4: #{tpu_custom_call.1} parent=1 // pred_region
      %s18 = ssub.s32 256, 256
      %19 = vsyncadd [#allocation5], %s18
      %s20 = sshll.u32 [#allocation4], 4
      %s21 = int_to_ptr.vmem [resolvable:$true] %s20
      %26 = dma.hbm_to_vmem [thread:$0]  %s0, 256, %s21, [#allocation5], 128, 128, 8
    $region5: #{tpu_custom_call.1} parent=1 // pred_fallthru
      _
    // Predicated region
    $region6: #{tpu_custom_call.1} parent=1 // pred_check
      _
    $region7: #{tpu_custom_call.1} parent=1 // pred_check_branch
      %28 = sbr.rel (0) target = $region9
    $region8: #{tpu_custom_call.1} parent=1 // pred_region
      _
    $region9: #{tpu_custom_call.1} parent=1 // pred_fallthru
      _
    // Predicated region
    $region10: #{tpu_custom_call.1} parent=1 // pred_check
      _
    $region11: #{tpu_custom_call.1} parent=1 // pred_check_branch
      %30 = sbr.rel (0) target = $region13
    $region12: #{tpu_custom_call.1} parent=1 // pred_region
      _
    $region13: #{tpu_custom_call.1} parent=1 // pred_fallthru
      _
    // Predicated region
    $region14: #{tpu_custom_call.1} parent=1 // pred_check
      _
    $region15: #{tpu_custom_call.1} parent=1 // pred_check_branch
      %32 = sbr.rel (0) target = $region17
    $region16: #{tpu_custom_call.1} parent=1 // pred_region
      %s34 = ssub.s32 2048, 2048
      %35 = vsyncadd [#allocation8], %s34
      %s36 = sshll.u32 [#allocation7], 4
      %s37 = int_to_ptr.vmem [resolvable:$true] %s36
      %42 = dma.hbm_to_vmem [thread:$0]  %s3, 2048, %s37, [#allocation8], 128, 128, 8
    $region17: #{tpu_custom_call.1} parent=1 // pred_fallthru
      _
    // Predicated region
    $region18: #{tpu_custom_call.1} parent=1 // pred_check
      _
    $region19: #{tpu_custom_call.1} parent=1 // pred_check_branch
      %44 = sbr.rel (0) target = $region21
    $region20: #{tpu_custom_call.1} parent=1 // pred_region
      _
    $region21: #{tpu_custom_call.1} parent=1 // pred_fallthru
      _
    // Predicated region
    $region22: #{tpu_custom_call.1} parent=1 // pred_check
      _
    $region23: #{tpu_custom_call.1} parent=1 // pred_check_branch
      %46 = sbr.rel (0) target = $region25
    $region24: #{tpu_custom_call.1} parent=1 // pred_region
      %s48 = ssub.s32 2048, 2048
      %49 = vsyncadd [#allocation8], %s48
      %s50 = sshll.u32 [#allocation9], 4
      %s51 = int_to_ptr.vmem [resolvable:$true] %s50
      %56 = dma.hbm_to_vmem [thread:$0]  %s5, 2048, %s51, [#allocation8], 128, 128, 8
    $region25: #{tpu_custom_call.1} parent=1 // pred_fallthru
      _
    // Predicated region
    $region26: #{tpu_custom_call.1} parent=1 // pred_check
      _
    $region27: #{tpu_custom_call.1} parent=1 // pred_check_branch
      %58 = sbr.rel (0) target = $region29
    $region28: #{tpu_custom_call.1} parent=1 // pred_region
      _
    $region29: #{tpu_custom_call.1} parent=1 // pred_fallthru
      _
    // Predicated region
    $region30: #{tpu_custom_call.1} parent=1 // pred_check
      _
    $region31: #{tpu_custom_call.1} parent=1 // pred_check_branch
      %60 = sbr.rel (0) target = $region33
    $region32: #{tpu_custom_call.1} parent=1 // pred_region
      %61 = dma.done [#allocation5], 256
    $region33: #{tpu_custom_call.1} parent=1 // pred_fallthru
      _
    // Predicated region
    $region34: #{tpu_custom_call.1} parent=1 // pred_check
      _
    $region35: #{tpu_custom_call.1} parent=1 // pred_check_branch
      %63 = sbr.rel (0) target = $region37
    $region36: #{tpu_custom_call.1} parent=1 // pred_region
      %64 = dma.done [#allocation8], 2048
    $region37: #{tpu_custom_call.1} parent=1 // pred_fallthru
      _
    // Predicated region
    $region38: #{tpu_custom_call.1} parent=1 // pred_check
      _
    $region39: #{tpu_custom_call.1} parent=1 // pred_check_branch
      %66 = sbr.rel (0) target = $region41
    $region40: #{tpu_custom_call.1} parent=1 // pred_region
      %67 = dma.done [#allocation8], 2048
    $region41: #{tpu_custom_call.1} parent=1 // pred_fallthru
      _
    %p68 = scmp.eq.s32.totalorder 0, 0
    // Predicated region
    $region42: #{tpu_custom_call.1} parent=1 // pred_check
      %p69 = pneg %p68
    $region43: #{tpu_custom_call.1} parent=1 // pred_check_branch
      %71 = sbr.rel (%p69) target = $region45
    $region44: #{tpu_custom_call.1} parent=1 // pred_region
      %v72 = vld [vmem:[#allocation4] sm:$0xff]
      %v73 = vld [vmem:[#allocation4 + $0x8] sm:$0xff]
      %v74 = vlaneseq
      %v75 = vand.u32 %v74, 127
      %vm76 = vcmp.lt.s32.totalorder %v75, 32
      %77 = vadd.xlane.f32.xlu0 %v72
      %v78 = vpop.xlane.xlu0 %77
      %79 = vadd.xlane.f32.xlu0 %v73
      %v80 = vpop.xlane.xlu0 %79
      %v81 = vmul.f32 %v78, 0.03125
      %v82 = vmul.f32 %v80, 0.03125
      %v83 = vsub.f32 %v72, %v81
      %v84 = vsub.f32 %v73, %v82
      %v85 = vsel %vm76, 1, 0
      %vm86 = vcmp.eq.s32.totalorder %v85, 1
      %v87 = vsel %vm86, %v83, 0.0
      %v88 = vsel %vm86, %v84, 0.0
      %v89 = vmul.f32 %v87, %v87
      %v90 = vmul.f32 %v88, %v88
      %91 = vadd.xlane.f32.xlu0 %v89
      %v92 = vpop.xlane.xlu0 %91
      %93 = vadd.xlane.f32.xlu0 %v90
      %v94 = vpop.xlane.xlu0 %93
      %v95 = vmul.f32 %v92, 0.03125
      %v96 = vmul.f32 %v94, 0.03125
      %v97 = vadd.f32 %v95, 1e-06
      %v98 = vadd.f32 %v96, 1e-06
      %v99 = vrsqrt.pop %v97
      %v100 = vrsqrt.pop %v98
      %v101 = vmul.f32 %v87, %v99
      %v102 = vmul.f32 %v88, %v100
      %v103 = vld [vmem:[%s1] sm:$0x1]
      %v105 = vlaneseq
      %v106 = vshrl.u32 %v105, 7
      %v107 = vsub.s32 0, %v106
      %v108 = vrot.slane %v103, %v107
      %v110 = vmul.f32 %v101, %v108
      %v111 = vmul.f32 %v102, %v108
      %v112 = vld [vmem:[%s2] sm:$0x1]
      %v114 = vlaneseq
      %v115 = vshrl.u32 %v114, 7
      %v116 = vsub.s32 0, %v115
      %v117 = vrot.slane %v112, %v116
      %v119 = vadd.f32 %v110, %v117
      %v120 = vadd.f32 %v111, %v117
      %121 = vst [vmem:[#allocation2] sm:$0xff] %v119
      %122 = vst [vmem:[#allocation2 + $0x8] sm:$0xff] %v120
      %123 = vst [vmem:[#allocation3] sm:$0xff] 0.0
      %124 = vst [vmem:[#allocation3 + $0x8] sm:$0xff] 0.0
    $region45: #{tpu_custom_call.1} parent=1 // pred_fallthru
      _
    %v125 = vld [vmem:[#allocation2] sm:$0xff]
    %v126 = vld [vmem:[#allocation2 + $0x8] sm:$0xff]
    %v127 = vld [vmem:[#allocation7] sm:$0xff]
    %v128 = vld [vmem:[#allocation7 + $0x8] sm:$0xff]
    %v129 = vld [vmem:[#allocation7 + $0x10] sm:$0xff]
    %v130 = vld [vmem:[#allocation7 + $0x18] sm:$0xff]
    %v131 = vld [vmem:[#allocation7 + $0x20] sm:$0xff]
    %v132 = vld [vmem:[#allocation7 + $0x28] sm:$0xff]
    %v133 = vld [vmem:[#allocation7 + $0x30] sm:$0xff]
    %v134 = vld [vmem:[#allocation7 + $0x38] sm:$0xff]
    %v135 = vld [vmem:[#allocation7 + $0x40] sm:$0xff]
    %v136 = vld [vmem:[#allocation7 + $0x48] sm:$0xff]
    %v137 = vld [vmem:[#allocation7 + $0x50] sm:$0xff]
    %v138 = vld [vmem:[#allocation7 + $0x58] sm:$0xff]
    %v139 = vld [vmem:[#allocation7 + $0x60] sm:$0xff]
    %v140 = vld [vmem:[#allocation7 + $0x68] sm:$0xff]
    %v141 = vld [vmem:[#allocation7 + $0x70] sm:$0xff]
    %v142 = vld [vmem:[#allocation7 + $0x78] sm:$0xff]
    %v143 = vld [vmem:[%s4] sm:$0x1]
    %v145 = vlaneseq
    %v146 = vshrl.u32 %v145, 7
    %v147 = vsub.s32 0, %v146
    %v148 = vrot.slane %v143, %v147
    %150 = vmatprep.subr.mxu0 0.0
    %151 = vmatpush1.msra.mxu0 %v142
    %152 = vmatprep.subr.mxu0 0.0
    %153 = vmatpush1.msra.mxu0 %v141
    %154 = vmatprep.subr.mxu0 0.0
    %155 = vmatpush1.msra.mxu0 %v140
    %156 = vmatprep.subr.mxu0 0.0
    %157 = vmatpush1.msra.mxu0 %v139
    %158 = vmatprep.subr.mxu0 0.0
    %159 = vmatpush1.msra.mxu0 %v138
    %160 = vmatprep.subr.mxu0 0.0
    %161 = vmatpush1.msra.mxu0 %v137
    %162 = vmatprep.subr.mxu0 0.0
    %163 = vmatpush1.msra.mxu0 %v136
    %164 = vmatprep.subr.mxu0 0.0
    %165 = vmatpush1.msra.mxu0 %v135
    %166 = vmatprep.subr.mxu0 0.0
    %167 = vmatpush1.msra.mxu0 %v134
    %168 = vmatprep.subr.mxu0 0.0
    %169 = vmatpush1.msra.mxu0 %v133
    %170 = vmatprep.subr.mxu0 0.0
    %171 = vmatpush1.msra.mxu0 %v132
    %172 = vmatprep.subr.mxu0 0.0
    %173 = vmatpush1.msra.mxu0 %v131
    %174 = vmatprep.subr.mxu0 0.0
    %175 = vmatpush1.msra.mxu0 %v130
    %176 = vmatprep.subr.mxu0 0.0
    %177 = vmatpush1.msra.mxu0 %v129
    %178 = vmatprep.subr.mxu0 0.0
    %179 = vmatpush1.msra.mxu0 %v128
    %180 = vmatprep.subr.mxu0 0.0
    %181 = vmatpush1.msra.mxu0 %v127
    %182 = vmatprep.subr.mxu0 0.0
    %183 = vmatpush2.msra.mxu0 0.0
    %184 = vmatprep.subr.mxu0 0.0
    %185 = vmatpush2.msra.mxu0 0.0
    %186 = vmatprep.subr.mxu0 0.0
    %187 = vmatpush2.msra.mxu0 0.0
    %188 = vmatprep.subr.mxu0 0.0
    %189 = vmatpush2.msra.mxu0 0.0
    %190 = vmatprep.subr.mxu0 0.0
    %191 = vmatpush2.msra.mxu0 0.0
    %192 = vmatprep.subr.mxu0 0.0
    %193 = vmatpush2.msra.mxu0 0.0
    %194 = vmatprep.subr.mxu0 0.0
    %195 = vmatpush2.msra.mxu0 0.0
    %196 = vmatprep.subr.mxu0 0.0
    %197 = vmatpush2.msra.mxu0 0.0
    %198 = vmatprep.subr.mxu0 0.0
    %199 = vmatpush2.msra.mxu0 0.0
    %200 = vmatprep.subr.mxu0 0.0
    %201 = vmatpush2.msra.mxu0 0.0
    %202 = vmatprep.subr.mxu0 0.0
    %203 = vmatpush2.msra.mxu0 0.0
    %204 = vmatprep.subr.mxu0 0.0
    %205 = vmatpush2.msra.mxu0 0.0
    %206 = vmatprep.subr.mxu0 0.0
    %207 = vmatpush2.msra.mxu0 0.0
    %208 = vmatprep.subr.mxu0 0.0
    %209 = vmatpush2.msra.mxu0 0.0
    %210 = vmatprep.subr.mxu0 0.0
    %211 = vmatpush2.msra.mxu0 0.0
    %212 = vmatprep.subr.mxu0 0.0
    %213 = vmatpush2.msra.mxu0 0.0
    %214 = vmatprep.mubr.f32.mxu0 0.0
    %215 = vmatmul.mubr.f32.gmra.mxu0 %v125
    %v216 = vpop.f32.mrf.mxu0
    %v217 = vadd.f32 %v148, %v216
    %v218 = vpop.f32.mrf.mxu0
    %219 = vmatprep.mubr.f32.mxu0 0.0
    %220 = vmatmul.mubr.f32.gmra.mxu0 %v126
    %v221 = vpop.f32.mrf.mxu0
    %v222 = vadd.f32 %v148, %v221
    %v223 = vpop.f32.mrf.mxu0
    %224 = vdwg.mxu0
    %v225 = vmul.f32 %v217, 0.5
    %v226 = vmul.f32 %v222, 0.5
    %v227 = vmul.f32 %v217, %v217
    %v228 = vmul.f32 %v222, %v222
    %v229 = vmul.f32 %v227, %v217
    %v230 = vmul.f32 %v228, %v222
    %v231 = vmul.f32 %v229, 0.044715
    %v232 = vmul.f32 %v230, 0.044715
    %v233 = vadd.f32 %v217, %v231
    %v234 = vadd.f32 %v222, %v232
    %v235 = vmul.f32 %v233, 0.7978846
    %v236 = vmul.f32 %v234, 0.7978846
    %v237 = vtanh.pop %v235
    %v238 = vtanh.pop %v236
    %v239 = vadd.f32 %v237, 1.0
    %v240 = vadd.f32 %v238, 1.0
    %v241 = vmul.f32 %v225, %v239
    %v242 = vmul.f32 %v226, %v240
    %v243 = vld [vmem:[#allocation3] sm:$0xff]
    %v244 = vld [vmem:[#allocation3 + $0x8] sm:$0xff]
    %v245 = vld [vmem:[#allocation9] sm:$0xff]
    %v246 = vld [vmem:[#allocation9 + $0x8] sm:$0xff]
    %v247 = vld [vmem:[#allocation9 + $0x10] sm:$0xff]
    %v248 = vld [vmem:[#allocation9 + $0x18] sm:$0xff]
    %v249 = vld [vmem:[#allocation9 + $0x20] sm:$0xff]
    %v250 = vld [vmem:[#allocation9 + $0x28] sm:$0xff]
    %v251 = vld [vmem:[#allocation9 + $0x30] sm:$0xff]
    %v252 = vld [vmem:[#allocation9 + $0x38] sm:$0xff]
    %v253 = vld [vmem:[#allocation9 + $0x40] sm:$0xff]
    %v254 = vld [vmem:[#allocation9 + $0x48] sm:$0xff]
    %v255 = vld [vmem:[#allocation9 + $0x50] sm:$0xff]
    %v256 = vld [vmem:[#allocation9 + $0x58] sm:$0xff]
    %v257 = vld [vmem:[#allocation9 + $0x60] sm:$0xff]
    %v258 = vld [vmem:[#allocation9 + $0x68] sm:$0xff]
    %v259 = vld [vmem:[#allocation9 + $0x70] sm:$0xff]
    %v260 = vld [vmem:[#allocation9 + $0x78] sm:$0xff]
    %261 = vmatprep.subr.mxu0 0.0
    %262 = vmatpush1.msra.mxu0 %v260
    %263 = vmatprep.subr.mxu0 0.0
    %264 = vmatpush1.msra.mxu0 %v259
    %265 = vmatprep.subr.mxu0 0.0
    %266 = vmatpush1.msra.mxu0 %v258
    %267 = vmatprep.subr.mxu0 0.0
    %268 = vmatpush1.msra.mxu0 %v257
    %269 = vmatprep.subr.mxu0 0.0
    %270 = vmatpush1.msra.mxu0 %v256
    %271 = vmatprep.subr.mxu0 0.0
    %272 = vmatpush1.msra.mxu0 %v255
    %273 = vmatprep.subr.mxu0 0.0
    %274 = vmatpush1.msra.mxu0 %v254
    %275 = vmatprep.subr.mxu0 0.0
    %276 = vmatpush1.msra.mxu0 %v253
    %277 = vmatprep.subr.mxu0 0.0
    %278 = vmatpush1.msra.mxu0 %v252
    %279 = vmatprep.subr.mxu0 0.0
    %280 = vmatpush1.msra.mxu0 %v251
    %281 = vmatprep.subr.mxu0 0.0
    %282 = vmatpush1.msra.mxu0 %v250
    %283 = vmatprep.subr.mxu0 0.0
    %284 = vmatpush1.msra.mxu0 %v249
    %285 = vmatprep.subr.mxu0 0.0
    %286 = vmatpush1.msra.mxu0 %v248
    %287 = vmatprep.subr.mxu0 0.0
    %288 = vmatpush1.msra.mxu0 %v247
    %289 = vmatprep.subr.mxu0 0.0
    %290 = vmatpush1.msra.mxu0 %v246
    %291 = vmatprep.subr.mxu0 0.0
    %292 = vmatpush1.msra.mxu0 %v245
    %293 = vmatprep.subr.mxu0 0.0
    %294 = vmatpush2.msra.mxu0 0.0
    %295 = vmatprep.subr.mxu0 0.0
    %296 = vmatpush2.msra.mxu0 0.0
    %297 = vmatprep.subr.mxu0 0.0
    %298 = vmatpush2.msra.mxu0 0.0
    %299 = vmatprep.subr.mxu0 0.0
    %300 = vmatpush2.msra.mxu0 0.0
    %301 = vmatprep.subr.mxu0 0.0
    %302 = vmatpush2.msra.mxu0 0.0
    %303 = vmatprep.subr.mxu0 0.0
    %304 = vmatpush2.msra.mxu0 0.0
    %305 = vmatprep.subr.mxu0 0.0
    %306 = vmatpush2.msra.mxu0 0.0
    %307 = vmatprep.subr.mxu0 0.0
    %308 = vmatpush2.msra.mxu0 0.0
    %309 = vmatprep.subr.mxu0 0.0
    %310 = vmatpush2.msra.mxu0 0.0
    %311 = vmatprep.subr.mxu0 0.0
    %312 = vmatpush2.msra.mxu0 0.0
    %313 = vmatprep.subr.mxu0 0.0
    %314 = vmatpush2.msra.mxu0 0.0
    %315 = vmatprep.subr.mxu0 0.0
    %316 = vmatpush2.msra.mxu0 0.0
    %317 = vmatprep.subr.mxu0 0.0
    %318 = vmatpush2.msra.mxu0 0.0
    %319 = vmatprep.subr.mxu0 0.0
    %320 = vmatpush2.msra.mxu0 0.0
    %321 = vmatprep.subr.mxu0 0.0
    %322 = vmatpush2.msra.mxu0 0.0
    %323 = vmatprep.subr.mxu0 0.0
    %324 = vmatpush2.msra.mxu0 0.0
    %325 = vmatprep.mubr.f32.mxu0 0.0
    %326 = vmatmul.mubr.f32.gmra.mxu0 %v241
    %v327 = vpop.f32.mrf.mxu0
    %v328 = vadd.f32 0.0, %v327
    %v329 = vpop.f32.mrf.mxu0
    %330 = vmatprep.mubr.f32.mxu0 0.0
    %331 = vmatmul.mubr.f32.gmra.mxu0 %v242
    %v332 = vpop.f32.mrf.mxu0
    %v333 = vadd.f32 0.0, %v332
    %v334 = vpop.f32.mrf.mxu0
    %335 = vdwg.mxu0
    %v336 = vadd.f32 %v243, %v328
    %v337 = vadd.f32 %v244, %v333
    %338 = vst [vmem:[#allocation3] sm:$0xff] %v336
    %339 = vst [vmem:[#allocation3 + $0x8] sm:$0xff] %v337
    // Predicated region
    $region46: #{tpu_custom_call.1} parent=1 // pred_check
      %p340 = pneg %p68
    $region47: #{tpu_custom_call.1} parent=1 // pred_check_branch
      %342 = sbr.rel (%p340) target = $region49
    $region48: #{tpu_custom_call.1} parent=1 // pred_region
      %v343 = vld [vmem:[#allocation3] sm:$0xff]
      %v344 = vld [vmem:[#allocation3 + $0x8] sm:$0xff]
      %v345 = vld [vmem:[%s6] sm:$0x1]
      %v347 = vlaneseq
      %v348 = vshrl.u32 %v347, 7
      %v349 = vsub.s32 0, %v348
      %v350 = vrot.slane %v345, %v349
      %v352 = vadd.f32 %v343, %v350
      %v353 = vadd.f32 %v344, %v350
      %v354 = vld [vmem:[#allocation4] sm:$0xff]
      %v355 = vld [vmem:[#allocation4 + $0x8] sm:$0xff]
      %v356 = vadd.f32 %v352, %v354
      %v357 = vadd.f32 %v353, %v355
      %358 = vst [vmem:[#allocation10] sm:$0xff] %v356
      %359 = vst [vmem:[#allocation10 + $0x8] sm:$0xff] %v357
    $region49: #{tpu_custom_call.1} parent=1 // pred_fallthru
      _
    // Predicated region
    $region50: #{tpu_custom_call.1} parent=1 // pred_check
      _
    $region51: #{tpu_custom_call.1} parent=1 // pred_check_branch
      %361 = sbr.rel (0) target = $region53
    $region52: #{tpu_custom_call.1} parent=1 // pred_region
      %s363 = ssub.s32 256, 256
      %364 = vsyncadd [#allocation6], %s363
      %s365 = sshll.u32 [#allocation10], 4
      %s366 = int_to_ptr.vmem [resolvable:$true] %s365
      %371 = dma.vmem_to_hbm [thread:$0]  %s366, 256, %s7, [#allocation6], 128, 128, 8
    $region53: #{tpu_custom_call.1} parent=1 // pred_fallthru
      _
    // Predicated region
    $region54: #{tpu_custom_call.1} parent=1 // pred_check
      _
    $region55: #{tpu_custom_call.1} parent=1 // pred_check_branch
      %373 = sbr.rel (0) target = $region57
    $region56: #{tpu_custom_call.1} parent=1 // pred_region
      %374 = dma.done [#allocation6], 256
    $region57: #{tpu_custom_call.1} parent=1 // pred_fallthru
      _
    %375 = vsyncpa [#allocation5], 1
    %376 = vsyncpa [#allocation8], 1
    %377 = vsyncpa [#allocation6], 1

</llo_original>
